<compile_context>
chip_gen: v7x
topology: tpu7x:2x2x1
jax: 0.10.0
libtpu: 0.0.40
codegen_flags: <defaults>
</compile_context>

<pallas_src>
import math
import functools

import jax
import jax.numpy as jnp
from jax.experimental import pallas as pl
from jax.experimental.pallas import tpu as pltpu

PAD_IDX = 0.0
BF16 = jnp.bfloat16
F32 = jnp.float32
VMEM_LIMIT = 48 * 1024 * 1024          # <= v7x 64 MiB physical, leaves headroom


# ----------------------------------------------------------------------------
# Kernel 1: channel-attention gates (imgs & kps, shared fc) + sum + resnet-stand-in
#           linear, fused.  Tiled over frames T (8-row blocks, "parallel").
# ----------------------------------------------------------------------------
def _gate_fuse_resnet_kernel(imgs_ref, kps_ref, caw_ref, w_ref, b_ref, o_ref):
    # imgs/kps: (C, TM, HW) bf16   caw: (C, C) f32 scalar table in SMEM
    # w: (C, HW, N) bf16 (per-channel slice of the pre-transposed resnet weight)
    # b: (1, N) f32      o: (TM, N) f32
    C = imgs_ref.shape[0]
    imgs = [imgs_ref[c].astype(F32) for c in range(C)]
    kps = [kps_ref[c].astype(F32) for c in range(C)]
    pooled_i = [jnp.mean(x, axis=-1, keepdims=True) for x in imgs]     # C x (TM, 1)
    pooled_k = [jnp.mean(x, axis=-1, keepdims=True) for x in kps]
    acc = jnp.zeros(o_ref.shape, F32)
    for co in range(C):
        # gate_co = sigmoid(sum_ci pooled[:, ci] * W[co, ci])  -- VPU only, no MXU
        gi = pooled_i[0] * caw_ref[co, 0]
        gk = pooled_k[0] * caw_ref[co, 0]
        for ci in range(1, C):
            gi = gi + pooled_i[ci] * caw_ref[co, ci]
            gk = gk + pooled_k[ci] * caw_ref[co, ci]
        fused_c = imgs[co] * jax.nn.sigmoid(gi) + kps[co] * jax.nn.sigmoid(gk)
        acc = acc + jnp.dot(fused_c.astype(BF16), w_ref[co],
                            preferred_element_type=F32)
    o_ref[...] = acc + b_ref[...]


def gate_fuse_resnet(p, imgs, kps, tm=8):
    T, C, H, W = imgs.shape
    HW = H * W
    N = p['res_b'].shape[0]
    Tpad = ((T + tm - 1) // tm) * tm

    def prep(x):   # (T, C, H, W) -> (C, Tpad, HW) bf16, channel-major for clean slicing
        x3 = jnp.transpose(x.reshape(T, C, HW), (1, 0, 2)).astype(BF16)
        return jnp.pad(x3, ((0, 0), (0, Tpad - T), (0, 0)))

    imgs3, kps3 = prep(imgs), prep(kps)
    # TODO(synk): pretrained torchvision ResNet18 backbone replaced with a single
    # linear projection with the same (T_total, feat_dim) interface.
    w3 = p['res_w'].T.reshape(C, HW, N).astype(BF16)
    b = p['res_b'].reshape(1, N).astype(F32)
    caw = p['ca_w'].astype(F32)

    cost = pl.CostEstimate(
        flops=int(2 * Tpad * C * HW * N),
        transcendentals=int(2 * Tpad * C),
        bytes_accessed=int(4 * Tpad * C * HW * 2 + C * HW * N * 2 + Tpad * N * 4))

    out = pl.pallas_call(
        _gate_fuse_resnet_kernel,
        grid=(Tpad // tm,),
        in_specs=[
            pl.BlockSpec((C, tm, HW), lambda i: (0, i, 0)),
            pl.BlockSpec((C, tm, HW), lambda i: (0, i, 0)),
            pl.BlockSpec(memory_space=pltpu.MemorySpace.SMEM),
            pl.BlockSpec((C, HW, N), lambda i: (0, 0, 0)),
            pl.BlockSpec((1, N), lambda i: (0, 0)),
        ],
        out_specs=pl.BlockSpec((tm, N), lambda i: (i, 0)),
        out_shape=jax.ShapeDtypeStruct((Tpad, N), F32),
        compiler_params=pltpu.CompilerParams(
            dimension_semantics=("parallel",), vmem_limit_bytes=VMEM_LIMIT),
        cost_estimate=cost,
    )(imgs3, kps3, caw, w3, b)
    return out[:T]


# ----------------------------------------------------------------------------
# Kernel 2: full TemporalConv (conv1d K5 + BN + ReLU + MaxPool2) x2, fused,
#           one video per grid step ("parallel" batch axis).
# ----------------------------------------------------------------------------
def _temporal_conv_kernel(x_ref, w1_ref, b1_ref, w2_ref, b2_ref, o_ref, s_ref):
    # x: (L, Cin) bf16    w1: (K1, Cin, Cout) bf16 (BN folded)   b1: (1, Cout) f32
    # w2: (K2, Cout, Cout) bf16 (BN folded)  b2: (1, Cout) f32   o: (L2p, Cout) bf16
    # s_ref: VMEM (L1, Cout) f32 scratch used to stage conv outputs for the pools.
    L, _ = x_ref.shape
    K1, _, Cout = w1_ref.shape
    K2 = w2_ref.shape[0]
    L1 = L - K1 + 1
    L1p = L1 // 2
    L2 = L1p - K2 + 1
    L2p = L2 // 2

    x = x_ref[...].astype(F32)
    acc = jnp.zeros((L1, Cout), F32)
    for k in range(K1):                                   # K=5 static unroll
        acc = acc + jnp.dot(x[k:k + L1, :].astype(BF16), w1_ref[k],
                            preferred_element_type=F32)
    s_ref[...] = jnp.maximum(acc + b1_ref[...], 0.0)
    # fused MaxPool1d(2): sublane-strided reads of the staged activation
    y1p = jnp.maximum(s_ref[pl.ds(0, L1p, stride=2), :],
                      s_ref[pl.ds(1, L1p, stride=2), :])  # (L1p, Cout) f32

    acc2 = jnp.zeros((L2, Cout), F32)
    for k in range(K2):
        acc2 = acc2 + jnp.dot(y1p[k:k + L2, :].astype(BF16), w2_ref[k],
                              preferred_element_type=F32)
    s_ref[0:L2, :] = jnp.maximum(acc2 + b2_ref[...], 0.0)
    y2p = jnp.maximum(s_ref[pl.ds(0, L2p, stride=2), :],
                      s_ref[pl.ds(1, L2p, stride=2), :])
    o_ref[...] = y2p.astype(o_ref.dtype)


def temporal_conv(p, x):
    # conv_type == 2: K5 -> P2 -> K5 -> P2.  x: (B, Nmax, Cin) bf16 -> (B, N', hidden) bf16
    B, L, Cin = x.shape
    Cout = p['tc1_b'].shape[0]

    def fold(w, b, g, beta, m, v, eps=1e-5):   # BatchNorm1d (eval) folded into conv
        s = g * jax.lax.rsqrt(v + eps)
        w_t = (w * s[:, None, None]).transpose(2, 1, 0).astype(BF16)   # (K, Cin, Cout)
        b_f = ((b - m) * s + beta).reshape(1, -1).astype(F32)
        return w_t, b_f

    w1, b1 = fold(p['tc1_w'], p['tc1_b'], p['bn1_g'], p['bn1_b'], p['bn1_m'], p['bn1_v'])
    w2, b2 = fold(p['tc2_w'], p['tc2_b'], p['bn2_g'], p['bn2_b'], p['bn2_m'], p['bn2_v'])
    K1, K2 = w1.shape[0], w2.shape[0]
    L1 = L - K1 + 1
    L1p = L1 // 2
    L2 = L1p - K2 + 1
    L2p = L2 // 2

    cost = pl.CostEstimate(
        flops=int(2 * B * (L1 * K1 * Cin * Cout + L2 * K2 * Cout * Cout)),
        transcendentals=0,
        bytes_accessed=int(B * L * Cin * 2 + (K1 * Cin + K2 * Cout) * Cout * 2
                           + B * L2p * Cout * 2))

    return pl.pallas_call(
        _temporal_conv_kernel,
        grid=(B,),
        in_specs=[
            pl.BlockSpec((None, L, Cin), lambda b: (b, 0, 0)),
            pl.BlockSpec((K1, Cin, Cout), lambda b: (0, 0, 0)),
            pl.BlockSpec((1, Cout), lambda b: (0, 0)),
            pl.BlockSpec((K2, Cout, Cout), lambda b: (0, 0, 0)),
            pl.BlockSpec((1, Cout), lambda b: (0, 0)),
        ],
        out_specs=pl.BlockSpec((None, L2p, Cout), lambda b: (b, 0, 0)),
        out_shape=jax.ShapeDtypeStruct((B, L2p, Cout), BF16),
        scratch_shapes=[pltpu.VMEM((L1, Cout), F32)],
        compiler_params=pltpu.CompilerParams(
            dimension_semantics=("parallel",), vmem_limit_bytes=VMEM_LIMIT),
        cost_estimate=cost,
    )(x, w1, b1, w2, b2)


# ----------------------------------------------------------------------------
# Kernel 3: nn.MultiheadAttention (cls-token query), one video per grid step.
#   Heads handled via a 0/1 head-sum matrix -> two lane-dense matmuls,
#   single full-depth output projection (no per-head / per-batch unrolls).
# ----------------------------------------------------------------------------
def _mha_kernel(cls_ref, kv_ref, wq_ref, bq_ref, wkv_ref, bkv_ref,
                wo_ref, bo_ref, hsum_ref, hexp_ref, o_ref, *, scale):
    D = wq_ref.shape[0]
    q = jnp.dot(cls_ref[...], wq_ref[...], preferred_element_type=F32) + bq_ref[...]    # (1, D)
    kv = jnp.dot(kv_ref[...], wkv_ref[...], preferred_element_type=F32) + bkv_ref[...]  # (S, 2D)
    kb = kv[:, 0:D]
    vb = kv[:, D:2 * D]
    # scores[s, h] = (q_h . k_{s,h}) * scale  via broadcast-multiply + head-sum matmul
    s = jnp.dot((kb * q).astype(BF16), hsum_ref[...],
                preferred_element_type=F32) * scale                                     # (S, H)
    m = jnp.max(s, axis=0, keepdims=True)
    e = jnp.exp(s - m)
    pn = e / jnp.sum(e, axis=0, keepdims=True)                                          # exact softmax
    p_full = jnp.dot(pn.astype(BF16), hexp_ref[...], preferred_element_type=F32)        # (S, D)
    ctx = jnp.sum(p_full * vb, axis=0, keepdims=True)                                   # (1, D) = concat heads
    out = jnp.dot(ctx.astype(BF16), wo_ref[...], preferred_element_type=F32) + bo_ref[...]
    o_ref[...] = out.astype(o_ref.dtype)


def cross_attention(p, cls2d, kv, num_heads=8):
    # nn.MultiheadAttention (batch_first) with the cls token as the (shared) query.
    # The original module does NOT pass key_padding_mask here, so none is applied.
    B, S, D = kv.shape
    E = D // num_heads
    W = p['mha_in_w']
    bqkv = p['mha_in_b']
    wq = W[:D].T.astype(BF16)
    wkv = jnp.concatenate([W[D:2 * D].T, W[2 * D:].T], axis=1).astype(BF16)   # (D, 2D)
    bq = bqkv[:D].reshape(1, D).astype(F32)
    bkv = jnp.concatenate([bqkv[D:2 * D], bqkv[2 * D:]]).reshape(1, 2 * D).astype(F32)
    wo = p['mha_out_w'].T.astype(BF16)
    bo = p['mha_out_b'].reshape(1, D).astype(F32)
    head_ids = jnp.arange(D) // E
    hsum = (head_ids[:, None] == jnp.arange(num_heads)[None, :]).astype(BF16)  # (D, H)
    hexp = hsum.T                                                              # (H, D)

    out = pl.pallas_call(
        functools.partial(_mha_kernel, scale=1.0 / math.sqrt(E)),
        grid=(B,),
        in_specs=[
            pl.BlockSpec((1, D), lambda b: (0, 0)),            # cls (shared query)
            pl.BlockSpec((None, S, D), lambda b: (b, 0, 0)),   # kv for this video
            pl.BlockSpec((D, D), lambda b: (0, 0)),
            pl.BlockSpec((1, D), lambda b: (0, 0)),
            pl.BlockSpec((D, 2 * D), lambda b: (0, 0)),
            pl.BlockSpec((1, 2 * D), lambda b: (0, 0)),
            pl.BlockSpec((D, D), lambda b: (0, 0)),
            pl.BlockSpec((1, D), lambda b: (0, 0)),
            pl.BlockSpec((D, num_heads), lambda b: (0, 0)),
            pl.BlockSpec((num_heads, D), lambda b: (0, 0)),
        ],
        out_specs=pl.BlockSpec((None, 1, D), lambda b: (b, 0, 0)),
        out_shape=jax.ShapeDtypeStruct((B, 1, D), BF16),
        compiler_params=pltpu.CompilerParams(
            dimension_semantics=("parallel",), vmem_limit_bytes=VMEM_LIMIT),
    )(cls2d.astype(BF16), kv.astype(BF16), wq, bq, wkv, bkv, wo, bo, hsum, hexp)
    return out.reshape(B, D)


# ----------------------------------------------------------------------------
# Kernel 4: generic row-tiled linear (+ optional ReLU), bf16 activations.
# ----------------------------------------------------------------------------
def _linear_kernel(x_ref, w_ref, b_ref, o_ref, *, relu):
    y = jnp.dot(x_ref[...], w_ref[...], preferred_element_type=F32) + b_ref[...]
    if relu:
        y = jnp.maximum(y, 0.0)
    o_ref[...] = y.astype(o_ref.dtype)


def linear_rows(x, w_t, b, relu=False, tm=8):
    """y = x @ w_t + b (optional ReLU); row-tiled; w_t is the (K, N) weight."""
    M, K = x.shape
    _, N = w_t.shape
    Mpad = ((M + tm - 1) // tm) * tm
    xp = jnp.pad(x.astype(BF16), ((0, Mpad - M), (0, 0)))
    out = pl.pallas_call(
        functools.partial(_linear_kernel, relu=relu),
        grid=(Mpad // tm,),
        in_specs=[pl.BlockSpec((tm, K), lambda i: (i, 0)),
                  pl.BlockSpec((K, N), lambda i: (0, 0)),
                  pl.BlockSpec((1, N), lambda i: (0, 0))],
        out_specs=pl.BlockSpec((tm, N), lambda i: (i, 0)),
        out_shape=jax.ShapeDtypeStruct((Mpad, N), BF16),
        compiler_params=pltpu.CompilerParams(
            dimension_semantics=("parallel",), vmem_limit_bytes=VMEM_LIMIT),
    )(xp, w_t.astype(BF16), b.reshape(1, N).astype(F32))
    return out[:M]


# ----------------------------------------------------------------------------
# Kernel 5: CLIP head -- both ProjectionHeads + L2-normalise + contrastive logits,
#           tiled over image rows (one tile at these sizes; text block is resident).
# ----------------------------------------------------------------------------
def _clip_head_kernel(img_ref, txt_ref,
                      iw1_ref, ib1_ref, iw2_ref, ib2_ref,
                      tw1_ref, tb1_ref, tw2_ref, tb2_ref,
                      ls_ref, li_ref):
    def proj(x, w1, b1, w2, b2):
        h = jnp.maximum(jnp.dot(x, w1[...], preferred_element_type=F32) + b1[...], 0.0)
        return jnp.dot(h.astype(BF16), w2[...], preferred_element_type=F32) + b2[...]

    img = proj(img_ref[...], iw1_ref, ib1_ref, iw2_ref, ib2_ref)          # f32
    txt = proj(txt_ref[...], tw1_ref, tb1_ref, tw2_ref, tb2_ref)          # f32
    # exact x / ||x|| (no epsilon), matching the PyTorch reference
    img_n = img / jnp.sqrt(jnp.sum(img * img, axis=-1, keepdims=True))
    txt_n = txt / jnp.sqrt(jnp.sum(txt * txt, axis=-1, keepdims=True))
    scale = jnp.exp(ls_ref[...])                                          # (1, 1)
    # final contraction kept in f32 for parity (tiny: (B, D) x (D, B))
    li_ref[...] = scale * jax.lax.dot_general(
        img_n, txt_n, (((1,), (1,)), ((), ())), preferred_element_type=F32)


def clip_head(p, img_in, txt_in):
    B, D = img_in.shape
    ip, tp = p['img_proj'], p['txt_proj']
    ls = p['logit_scale'].reshape(1, 1).astype(F32)
    TB = B   # one image-row tile at these sizes; grid structure ready for larger B
    li = pl.pallas_call(
        _clip_head_kernel,
        grid=(B // TB,),
        in_specs=[
            pl.BlockSpec((TB, D), lambda i: (i, 0)),
            pl.BlockSpec((B, D), lambda i: (0, 0)),
            pl.BlockSpec((D, D), lambda i: (0, 0)), pl.BlockSpec((1, D), lambda i: (0, 0)),
            pl.BlockSpec((D, D), lambda i: (0, 0)), pl.BlockSpec((1, D), lambda i: (0, 0)),
            pl.BlockSpec((D, D), lambda i: (0, 0)), pl.BlockSpec((1, D), lambda i: (0, 0)),
            pl.BlockSpec((D, D), lambda i: (0, 0)), pl.BlockSpec((1, D), lambda i: (0, 0)),
            pl.BlockSpec((1, 1), lambda i: (0, 0)),
        ],
        out_specs=pl.BlockSpec((TB, B), lambda i: (i, 0)),
        out_shape=jax.ShapeDtypeStruct((B, B), F32),
        compiler_params=pltpu.CompilerParams(
            dimension_semantics=("parallel",), vmem_limit_bytes=VMEM_LIMIT),
    )(img_in.astype(BF16), txt_in.astype(BF16),
      ip['w1'].T.astype(BF16), ip['b1'].reshape(1, D).astype(F32),
      ip['w2'].T.astype(BF16), ip['b2'].reshape(1, D).astype(F32),
      tp['w1'].T.astype(BF16), tp['b1'].reshape(1, D).astype(F32),
      tp['w2'].T.astype(BF16), tp['b2'].reshape(1, D).astype(F32),
      ls)
    return li, li.T                     # logits_per_text == logits_per_image.T


# ----------------------------------------------------------------------------
# Model glue
# ----------------------------------------------------------------------------
def pad_and_batch(feats, lengths, pad_value=PAD_IDX):
    # pad_sequence(batch_first=True): one update-slice per video into a padded buffer.
    n_max = max(lengths)
    B = len(lengths)
    out = jnp.full((B, n_max, feats.shape[-1]), pad_value, feats.dtype)
    start = 0
    for i, L in enumerate(lengths):
        out = out.at[i, :L].set(feats[start:start + L])
        start += L
    return out


def image_clip(p, imgs, kps, lengths):
    # FeatureExtracter: CA gates + sum + resnet-stand-in projection in one fused kernel.
    feats2d = gate_fuse_resnet(p, imgs, kps)                   # (T, F) f32
    images = pad_and_batch(feats2d, lengths, PAD_IDX)          # (B, Nmax, F) f32 (returned)
    x = temporal_conv(p, images.astype(BF16))                  # (B, N, D) bf16
    B, N, D = x.shape
    cls2d = p['cls_token'].reshape(1, D).astype(BF16)
    cls = jnp.broadcast_to(cls2d[None], (B, 1, D))
    kv = jnp.concatenate([cls, x], axis=1)                     # (B, N+1, D) bf16
    # TODO(synk): pretrained MBart visual trans_encoder skipped -- its last_hidden_state
    # is not consumed by the returned features in the original forward.
    refined = cross_attention(p, cls2d, kv)                    # (B, D) bf16 (pre-projection)
    return refined, images


def text_clip(p, input_ids, attention_mask):
    # TODO(synk): pretrained MBart text encoder replaced by an embedding lookup +
    # Linear+ReLU stand-in producing (B, L, D) hidden states.
    B, L = input_ids.shape
    emb = jnp.take(p['txt_emb'], input_ids, axis=0)            # (B, L, D)
    D = emb.shape[-1]
    text_features = linear_rows(emb.reshape(B * L, D), p['txt_enc_w'].T,
                                p['txt_enc_b'], relu=True).reshape(B, L, D)
    # Matches the spec exactly: eos position = input_ids.argmax(dim=-1).
    eos_idx = jnp.argmax(input_ids, axis=-1)
    eos_feats = text_features[jnp.arange(B), eos_idx]          # (B, D) (pre-projection)
    return eos_feats, text_features


def slrclip_forward(p, src_input, tgt_input):
    refined, frames_feature = image_clip(
        p, src_input['imgs_id'], src_input['kps_id'], src_input['src_length_batch'])
    eos_feats, _encoder_hidden_states = text_clip(
        p, tgt_input['input_ids'], tgt_input['attention_mask'])
    logits_per_image, logits_per_text = clip_head(p, refined, eos_feats)
    ground_truth = jnp.eye(logits_per_image.shape[0], dtype=logits_per_image.dtype)
    return logits_per_image, logits_per_text, ground_truth, frames_feature


# ----------------------------------------------------------------------------
# Deterministic parameter init (synthetic; shapes follow the module __init__)
# ----------------------------------------------------------------------------
def init_params(key, embed_dim=128, feat2d=128, C=3, H=8, W=8, vocab=64):
    ks = iter(jax.random.split(key, 40))
    n = lambda shape, s=0.05: s * jax.random.normal(next(ks), shape, F32)
    p = {
        # SimpleChannelAttention fc (no bias)
        'ca_w': n((C, C), 0.3),
        # ResNet stand-in: (C*H*W) -> feat2d
        'res_w': n((feat2d, C * H * W)), 'res_b': n((feat2d,)),
        # TemporalConv: K5 -> BN -> ReLU -> P2 -> K5 -> BN -> ReLU -> P2
        'tc1_w': n((embed_dim, feat2d, 5)), 'tc1_b': n((embed_dim,)),
        'bn1_g': 1.0 + n((embed_dim,), 0.1), 'bn1_b': n((embed_dim,), 0.1),
        'bn1_m': jnp.zeros((embed_dim,)), 'bn1_v': jnp.ones((embed_dim,)),
        'tc2_w': n((embed_dim, embed_dim, 5)), 'tc2_b': n((embed_dim,)),
        'bn2_g': 1.0 + n((embed_dim,), 0.1), 'bn2_b': n((embed_dim,), 0.1),
        'bn2_m': jnp.zeros((embed_dim,)), 'bn2_v': jnp.ones((embed_dim,)),
        # ImageCLIP
        'cls_token': n((1, 1, embed_dim), 1.0),
        'mha_in_w': n((3 * embed_dim, embed_dim)), 'mha_in_b': n((3 * embed_dim,)),
        'mha_out_w': n((embed_dim, embed_dim)), 'mha_out_b': n((embed_dim,)),
        'img_proj': {'w1': n((embed_dim, embed_dim)), 'b1': n((embed_dim,)),
                     'w2': n((embed_dim, embed_dim)), 'b2': n((embed_dim,))},
        # TextCLIP stand-in
        'txt_emb': n((vocab, embed_dim), 0.2),
        'txt_enc_w': n((embed_dim, embed_dim)), 'txt_enc_b': n((embed_dim,)),
        'txt_proj': {'w1': n((embed_dim, embed_dim)), 'b1': n((embed_dim,)),
                     'w2': n((embed_dim, embed_dim)), 'b2': n((embed_dim,))},
        # SLRCLIP
        'logit_scale': jnp.array(math.log(1.0 / 0.07), F32),
    }
    return p


if __name__ == "__main__":
    key = jax.random.PRNGKey(0)
    k_imgs, k_kps, k_ids, k_par = jax.random.split(key, 4)

    lengths = [16, 20]                     # frames per video (2 videos)
    T_total = sum(lengths)
    C, H, W = 3, 8, 8
    embed_dim, feat2d, vocab = 128, 128, 64     # lane-dense (multiple-of-128) features
    B_txt, L_txt = 2, 8

    src_input = {
        'imgs_id': jax.random.normal(k_imgs, (T_total, C, H, W), F32),
        'kps_id': jax.random.normal(k_kps, (T_total, C, H, W), F32),
        'src_length_batch': lengths,
        'attention_mask': jnp.ones((2, max(lengths)), F32),
    }
    tgt_input = {
        'input_ids': jax.random.randint(k_ids, (B_txt, L_txt), 0, vocab),
        'attention_mask': jnp.ones((B_txt, L_txt), F32),
    }

    params = init_params(k_par, embed_dim=embed_dim, feat2d=feat2d,
                         C=C, H=H, W=W, vocab=vocab)

    outs = slrclip_forward(params, src_input, tgt_input)
    outs = jax.block_until_ready(outs)

    logits_per_image, logits_per_text, ground_truth, frames_feature = outs
    assert logits_per_image.shape == (2, 2)
    assert logits_per_text.shape == (2, 2)
    assert ground_truth.shape == (2, 2)
    assert frames_feature.shape == (2, max(lengths), feat2d)
    assert bool(jnp.all(jnp.isfinite(logits_per_image)))
    assert bool(jnp.all(jnp.isfinite(logits_per_text)))
    print("KERNEL_OK")
</pallas_src>

<mosaic_0001>
module attributes {stable_mosaic.version = 11 : i64} {
  func.func @_gate_fuse_resnet_kernel(%arg0: i32, %arg1: memref<3x8x64xbf16, #tpu.memory_space<vmem>>, %arg2: memref<3x8x64xbf16, #tpu.memory_space<vmem>>, %arg3: memref<3x3xf32, #tpu.memory_space<smem>>, %arg4: memref<3x64x128xbf16, #tpu.memory_space<vmem>>, %arg5: memref<1x128xf32, #tpu.memory_space<vmem>>, %arg6: memref<8x128xf32, #tpu.memory_space<vmem>>) attributes {dimension_semantics = [#tpu.dimension_semantics<parallel>], iteration_bounds = array<i64: 5>, scalar_prefetch = 0 : i64, scratch_operands = 0 : i64, tpu.core_type = #tpu.core_type<tc>, window_params = [{transform_indices = @transform_0, window_bounds = array<i64: 3, 8, 64>}, {transform_indices = @transform_1, window_bounds = array<i64: 3, 8, 64>}, {transform_indices = @transform_2, window_bounds = array<i64: 3, 3>}, {pipeline_mode = #tpu.pipeline_mode<synchronous>, transform_indices = @transform_3, window_bounds = array<i64: 3, 64, 128>}, {pipeline_mode = #tpu.pipeline_mode<synchronous>, transform_indices = @transform_4, window_bounds = array<i64: 1, 128>}, {transform_indices = @transform_5, window_bounds = array<i64: 8, 128>}]} {
    %c0 = arith.constant 0 : index
    %c0_0 = arith.constant 0 : index
    %c0_1 = arith.constant 0 : index
    %0 = vector.load %arg1[%c0, %c0_0, %c0_1] : memref<3x8x64xbf16, #tpu.memory_space<vmem>>, vector<1x8x64xbf16>
    %1 = vector.shape_cast %0 : vector<1x8x64xbf16> to vector<8x64xbf16>
    %2 = arith.extf %1 : vector<8x64xbf16> to vector<8x64xf32>
    %c1 = arith.constant 1 : index
    %c0_2 = arith.constant 0 : index
    %c0_3 = arith.constant 0 : index
    %3 = vector.load %arg1[%c1, %c0_2, %c0_3] : memref<3x8x64xbf16, #tpu.memory_space<vmem>>, vector<1x8x64xbf16>
    %4 = vector.shape_cast %3 : vector<1x8x64xbf16> to vector<8x64xbf16>
    %5 = arith.extf %4 : vector<8x64xbf16> to vector<8x64xf32>
    %c2 = arith.constant 2 : index
    %c0_4 = arith.constant 0 : index
    %c0_5 = arith.constant 0 : index
    %6 = vector.load %arg1[%c2, %c0_4, %c0_5] : memref<3x8x64xbf16, #tpu.memory_space<vmem>>, vector<1x8x64xbf16>
    %7 = vector.shape_cast %6 : vector<1x8x64xbf16> to vector<8x64xbf16>
    %8 = arith.extf %7 : vector<8x64xbf16> to vector<8x64xf32>
    %c0_6 = arith.constant 0 : index
    %c0_7 = arith.constant 0 : index
    %c0_8 = arith.constant 0 : index
    %9 = vector.load %arg2[%c0_6, %c0_7, %c0_8] : memref<3x8x64xbf16, #tpu.memory_space<vmem>>, vector<1x8x64xbf16>
    %10 = vector.shape_cast %9 : vector<1x8x64xbf16> to vector<8x64xbf16>
    %11 = arith.extf %10 : vector<8x64xbf16> to vector<8x64xf32>
    %c1_9 = arith.constant 1 : index
    %c0_10 = arith.constant 0 : index
    %c0_11 = arith.constant 0 : index
    %12 = vector.load %arg2[%c1_9, %c0_10, %c0_11] : memref<3x8x64xbf16, #tpu.memory_space<vmem>>, vector<1x8x64xbf16>
    %13 = vector.shape_cast %12 : vector<1x8x64xbf16> to vector<8x64xbf16>
    %14 = arith.extf %13 : vector<8x64xbf16> to vector<8x64xf32>
    %c2_12 = arith.constant 2 : index
    %c0_13 = arith.constant 0 : index
    %c0_14 = arith.constant 0 : index
    %15 = vector.load %arg2[%c2_12, %c0_13, %c0_14] : memref<3x8x64xbf16, #tpu.memory_space<vmem>>, vector<1x8x64xbf16>
    %16 = vector.shape_cast %15 : vector<1x8x64xbf16> to vector<8x64xbf16>
    %17 = arith.extf %16 : vector<8x64xbf16> to vector<8x64xf32>
    %cst = arith.constant dense<0.000000e+00> : vector<8xf32>
    %18 = vector.multi_reduction <add>, %2, %cst [1] : vector<8x64xf32> to vector<8xf32>
    %19 = vector.shape_cast %18 : vector<8xf32> to vector<8x1xf32>
    %cst_15 = arith.constant 6.400000e+01 : f32
    %20 = vector.broadcast %cst_15 : f32 to vector<8x1xf32>
    %21 = arith.divf %19, %20 : vector<8x1xf32>
    %cst_16 = arith.constant dense<0.000000e+00> : vector<8xf32>
    %22 = vector.multi_reduction <add>, %5, %cst_16 [1] : vector<8x64xf32> to vector<8xf32>
    %23 = vector.shape_cast %22 : vector<8xf32> to vector<8x1xf32>
    %cst_17 = arith.constant 6.400000e+01 : f32
    %24 = vector.broadcast %cst_17 : f32 to vector<8x1xf32>
    %25 = arith.divf %23, %24 : vector<8x1xf32>
    %cst_18 = arith.constant dense<0.000000e+00> : vector<8xf32>
    %26 = vector.multi_reduction <add>, %8, %cst_18 [1] : vector<8x64xf32> to vector<8xf32>
    %27 = vector.shape_cast %26 : vector<8xf32> to vector<8x1xf32>
    %cst_19 = arith.constant 6.400000e+01 : f32
    %28 = vector.broadcast %cst_19 : f32 to vector<8x1xf32>
    %29 = arith.divf %27, %28 : vector<8x1xf32>
    %cst_20 = arith.constant dense<0.000000e+00> : vector<8xf32>
    %30 = vector.multi_reduction <add>, %11, %cst_20 [1] : vector<8x64xf32> to vector<8xf32>
    %31 = vector.shape_cast %30 : vector<8xf32> to vector<8x1xf32>
    %cst_21 = arith.constant 6.400000e+01 : f32
    %32 = vector.broadcast %cst_21 : f32 to vector<8x1xf32>
    %33 = arith.divf %31, %32 : vector<8x1xf32>
    %cst_22 = arith.constant dense<0.000000e+00> : vector<8xf32>
    %34 = vector.multi_reduction <add>, %14, %cst_22 [1] : vector<8x64xf32> to vector<8xf32>
    %35 = vector.shape_cast %34 : vector<8xf32> to vector<8x1xf32>
    %cst_23 = arith.constant 6.400000e+01 : f32
    %36 = vector.broadcast %cst_23 : f32 to vector<8x1xf32>
    %37 = arith.divf %35, %36 : vector<8x1xf32>
    %cst_24 = arith.constant dense<0.000000e+00> : vector<8xf32>
    %38 = vector.multi_reduction <add>, %17, %cst_24 [1] : vector<8x64xf32> to vector<8xf32>
    %39 = vector.shape_cast %38 : vector<8xf32> to vector<8x1xf32>
    %cst_25 = arith.constant 6.400000e+01 : f32
    %40 = vector.broadcast %cst_25 : f32 to vector<8x1xf32>
    %41 = arith.divf %39, %40 : vector<8x1xf32>
    %cst_26 = arith.constant 0.000000e+00 : f32
    %42 = vector.broadcast %cst_26 : f32 to vector<8x128xf32>
    %c0_27 = arith.constant 0 : index
    %c0_28 = arith.constant 0 : index
    %43 = memref.load %arg3[%c0_27, %c0_28] : memref<3x3xf32, #tpu.memory_space<smem>>
    %44 = vector.broadcast %43 : f32 to vector<8x1xf32>
    %45 = arith.mulf %21, %44 : vector<8x1xf32>
    %c0_29 = arith.constant 0 : index
    %c0_30 = arith.constant 0 : index
    %46 = memref.load %arg3[%c0_29, %c0_30] : memref<3x3xf32, #tpu.memory_space<smem>>
    %47 = vector.broadcast %46 : f32 to vector<8x1xf32>
    %48 = arith.mulf %33, %47 : vector<8x1xf32>
    %c0_31 = arith.constant 0 : index
    %c1_32 = arith.constant 1 : index
    %49 = memref.load %arg3[%c0_31, %c1_32] : memref<3x3xf32, #tpu.memory_space<smem>>
    %50 = vector.broadcast %49 : f32 to vector<8x1xf32>
    %51 = arith.mulf %25, %50 : vector<8x1xf32>
    %52 = arith.addf %45, %51 : vector<8x1xf32>
    %c0_33 = arith.constant 0 : index
    %c1_34 = arith.constant 1 : index
    %53 = memref.load %arg3[%c0_33, %c1_34] : memref<3x3xf32, #tpu.memory_space<smem>>
    %54 = vector.broadcast %53 : f32 to vector<8x1xf32>
    %55 = arith.mulf %37, %54 : vector<8x1xf32>
    %56 = arith.addf %48, %55 : vector<8x1xf32>
    %c0_35 = arith.constant 0 : index
    %c2_36 = arith.constant 2 : index
    %57 = memref.load %arg3[%c0_35, %c2_36] : memref<3x3xf32, #tpu.memory_space<smem>>
    %58 = vector.broadcast %57 : f32 to vector<8x1xf32>
    %59 = arith.mulf %29, %58 : vector<8x1xf32>
    %60 = arith.addf %52, %59 : vector<8x1xf32>
    %c0_37 = arith.constant 0 : index
    %c2_38 = arith.constant 2 : index
    %61 = memref.load %arg3[%c0_37, %c2_38] : memref<3x3xf32, #tpu.memory_space<smem>>
    %62 = vector.broadcast %61 : f32 to vector<8x1xf32>
    %63 = arith.mulf %41, %62 : vector<8x1xf32>
    %64 = arith.addf %56, %63 : vector<8x1xf32>
    %65 = arith.negf %60 : vector<8x1xf32>
    %66 = math.exp %65 : vector<8x1xf32>
    %cst_39 = arith.constant 1.000000e+00 : f32
    %67 = vector.broadcast %cst_39 : f32 to vector<8x1xf32>
    %68 = arith.addf %67, %66 : vector<8x1xf32>
    %69 = arith.divf %67, %68 : vector<8x1xf32>
    %70 = vector.broadcast %69 : vector<8x1xf32> to vector<8x64xf32>
    %71 = arith.mulf %2, %70 : vector<8x64xf32>
    %72 = arith.negf %64 : vector<8x1xf32>
    %73 = math.exp %72 : vector<8x1xf32>
    %cst_40 = arith.constant 1.000000e+00 : f32
    %74 = vector.broadcast %cst_40 : f32 to vector<8x1xf32>
    %75 = arith.addf %74, %73 : vector<8x1xf32>
    %76 = arith.divf %74, %75 : vector<8x1xf32>
    %77 = vector.broadcast %76 : vector<8x1xf32> to vector<8x64xf32>
    %78 = arith.mulf %11, %77 : vector<8x64xf32>
    %79 = arith.addf %71, %78 : vector<8x64xf32>
    %80 = arith.truncf %79 : vector<8x64xf32> to vector<8x64xbf16>
    %c0_41 = arith.constant 0 : index
    %c0_42 = arith.constant 0 : index
    %c0_43 = arith.constant 0 : index
    %81 = vector.load %arg4[%c0_41, %c0_42, %c0_43] : memref<3x64x128xbf16, #tpu.memory_space<vmem>>, vector<1x64x128xbf16>
    %82 = vector.shape_cast %81 : vector<1x64x128xbf16> to vector<64x128xbf16>
    %cst_44 = arith.constant dense<0.000000e+00> : vector<8x128xf32>
    %83 = tpu.matmul %80, %82, %cst_44 {dimension_numbers = #tpu.dot_dimension_numbers<[1], [0], [0], [1], [0, 0, 1, 1], [], []>} : vector<8x64xbf16>, vector<64x128xbf16>, vector<8x128xf32> -> vector<8x128xf32>
    %84 = arith.addf %42, %83 : vector<8x128xf32>
    %c1_45 = arith.constant 1 : index
    %c0_46 = arith.constant 0 : index
    %85 = memref.load %arg3[%c1_45, %c0_46] : memref<3x3xf32, #tpu.memory_space<smem>>
    %86 = vector.broadcast %85 : f32 to vector<8x1xf32>
    %87 = arith.mulf %21, %86 : vector<8x1xf32>
    %c1_47 = arith.constant 1 : index
    %c0_48 = arith.constant 0 : index
    %88 = memref.load %arg3[%c1_47, %c0_48] : memref<3x3xf32, #tpu.memory_space<smem>>
    %89 = vector.broadcast %88 : f32 to vector<8x1xf32>
    %90 = arith.mulf %33, %89 : vector<8x1xf32>
    %c1_49 = arith.constant 1 : index
    %c1_50 = arith.constant 1 : index
    %91 = memref.load %arg3[%c1_49, %c1_50] : memref<3x3xf32, #tpu.memory_space<smem>>
    %92 = vector.broadcast %91 : f32 to vector<8x1xf32>
    %93 = arith.mulf %25, %92 : vector<8x1xf32>
    %94 = arith.addf %87, %93 : vector<8x1xf32>
    %c1_51 = arith.constant 1 : index
    %c1_52 = arith.constant 1 : index
    %95 = memref.load %arg3[%c1_51, %c1_52] : memref<3x3xf32, #tpu.memory_space<smem>>
    %96 = vector.broadcast %95 : f32 to vector<8x1xf32>
    %97 = arith.mulf %37, %96 : vector<8x1xf32>
    %98 = arith.addf %90, %97 : vector<8x1xf32>
    %c1_53 = arith.constant 1 : index
    %c2_54 = arith.constant 2 : index
    %99 = memref.load %arg3[%c1_53, %c2_54] : memref<3x3xf32, #tpu.memory_space<smem>>
    %100 = vector.broadcast %99 : f32 to vector<8x1xf32>
    %101 = arith.mulf %29, %100 : vector<8x1xf32>
    %102 = arith.addf %94, %101 : vector<8x1xf32>
    %c1_55 = arith.constant 1 : index
    %c2_56 = arith.constant 2 : index
    %103 = memref.load %arg3[%c1_55, %c2_56] : memref<3x3xf32, #tpu.memory_space<smem>>
    %104 = vector.broadcast %103 : f32 to vector<8x1xf32>
    %105 = arith.mulf %41, %104 : vector<8x1xf32>
    %106 = arith.addf %98, %105 : vector<8x1xf32>
    %107 = arith.negf %102 : vector<8x1xf32>
    %108 = math.exp %107 : vector<8x1xf32>
    %cst_57 = arith.constant 1.000000e+00 : f32
    %109 = vector.broadcast %cst_57 : f32 to vector<8x1xf32>
    %110 = arith.addf %109, %108 : vector<8x1xf32>
    %111 = arith.divf %109, %110 : vector<8x1xf32>
    %112 = vector.broadcast %111 : vector<8x1xf32> to vector<8x64xf32>
    %113 = arith.mulf %5, %112 : vector<8x64xf32>
    %114 = arith.negf %106 : vector<8x1xf32>
    %115 = math.exp %114 : vector<8x1xf32>
    %cst_58 = arith.constant 1.000000e+00 : f32
    %116 = vector.broadcast %cst_58 : f32 to vector<8x1xf32>
    %117 = arith.addf %116, %115 : vector<8x1xf32>
    %118 = arith.divf %116, %117 : vector<8x1xf32>
    %119 = vector.broadcast %118 : vector<8x1xf32> to vector<8x64xf32>
    %120 = arith.mulf %14, %119 : vector<8x64xf32>
    %121 = arith.addf %113, %120 : vector<8x64xf32>
    %122 = arith.truncf %121 : vector<8x64xf32> to vector<8x64xbf16>
    %c1_59 = arith.constant 1 : index
    %c0_60 = arith.constant 0 : index
    %c0_61 = arith.constant 0 : index
    %123 = vector.load %arg4[%c1_59, %c0_60, %c0_61] : memref<3x64x128xbf16, #tpu.memory_space<vmem>>, vector<1x64x128xbf16>
    %124 = vector.shape_cast %123 : vector<1x64x128xbf16> to vector<64x128xbf16>
    %cst_62 = arith.constant dense<0.000000e+00> : vector<8x128xf32>
    %125 = tpu.matmul %122, %124, %cst_62 {dimension_numbers = #tpu.dot_dimension_numbers<[1], [0], [0], [1], [0, 0, 1, 1], [], []>} : vector<8x64xbf16>, vector<64x128xbf16>, vector<8x128xf32> -> vector<8x128xf32>
    %126 = arith.addf %84, %125 : vector<8x128xf32>
    %c2_63 = arith.constant 2 : index
    %c0_64 = arith.constant 0 : index
    %127 = memref.load %arg3[%c2_63, %c0_64] : memref<3x3xf32, #tpu.memory_space<smem>>
    %128 = vector.broadcast %127 : f32 to vector<8x1xf32>
    %129 = arith.mulf %21, %128 : vector<8x1xf32>
    %c2_65 = arith.constant 2 : index
    %c0_66 = arith.constant 0 : index
    %130 = memref.load %arg3[%c2_65, %c0_66] : memref<3x3xf32, #tpu.memory_space<smem>>
    %131 = vector.broadcast %130 : f32 to vector<8x1xf32>
    %132 = arith.mulf %33, %131 : vector<8x1xf32>
    %c2_67 = arith.constant 2 : index
    %c1_68 = arith.constant 1 : index
    %133 = memref.load %arg3[%c2_67, %c1_68] : memref<3x3xf32, #tpu.memory_space<smem>>
    %134 = vector.broadcast %133 : f32 to vector<8x1xf32>
    %135 = arith.mulf %25, %134 : vector<8x1xf32>
    %136 = arith.addf %129, %135 : vector<8x1xf32>
    %c2_69 = arith.constant 2 : index
    %c1_70 = arith.constant 1 : index
    %137 = memref.load %arg3[%c2_69, %c1_70] : memref<3x3xf32, #tpu.memory_space<smem>>
    %138 = vector.broadcast %137 : f32 to vector<8x1xf32>
    %139 = arith.mulf %37, %138 : vector<8x1xf32>
    %140 = arith.addf %132, %139 : vector<8x1xf32>
    %c2_71 = arith.constant 2 : index
    %c2_72 = arith.constant 2 : index
    %141 = memref.load %arg3[%c2_71, %c2_72] : memref<3x3xf32, #tpu.memory_space<smem>>
    %142 = vector.broadcast %141 : f32 to vector<8x1xf32>
    %143 = arith.mulf %29, %142 : vector<8x1xf32>
    %144 = arith.addf %136, %143 : vector<8x1xf32>
    %c2_73 = arith.constant 2 : index
    %c2_74 = arith.constant 2 : index
    %145 = memref.load %arg3[%c2_73, %c2_74] : memref<3x3xf32, #tpu.memory_space<smem>>
    %146 = vector.broadcast %145 : f32 to vector<8x1xf32>
    %147 = arith.mulf %41, %146 : vector<8x1xf32>
    %148 = arith.addf %140, %147 : vector<8x1xf32>
    %149 = arith.negf %144 : vector<8x1xf32>
    %150 = math.exp %149 : vector<8x1xf32>
    %cst_75 = arith.constant 1.000000e+00 : f32
    %151 = vector.broadcast %cst_75 : f32 to vector<8x1xf32>
    %152 = arith.addf %151, %150 : vector<8x1xf32>
    %153 = arith.divf %151, %152 : vector<8x1xf32>
    %154 = vector.broadcast %153 : vector<8x1xf32> to vector<8x64xf32>
    %155 = arith.mulf %8, %154 : vector<8x64xf32>
    %156 = arith.negf %148 : vector<8x1xf32>
    %157 = math.exp %156 : vector<8x1xf32>
    %cst_76 = arith.constant 1.000000e+00 : f32
    %158 = vector.broadcast %cst_76 : f32 to vector<8x1xf32>
    %159 = arith.addf %158, %157 : vector<8x1xf32>
    %160 = arith.divf %158, %159 : vector<8x1xf32>
    %161 = vector.broadcast %160 : vector<8x1xf32> to vector<8x64xf32>
    %162 = arith.mulf %17, %161 : vector<8x64xf32>
    %163 = arith.addf %155, %162 : vector<8x64xf32>
    %164 = arith.truncf %163 : vector<8x64xf32> to vector<8x64xbf16>
    %c2_77 = arith.constant 2 : index
    %c0_78 = arith.constant 0 : index
    %c0_79 = arith.constant 0 : index
    %165 = vector.load %arg4[%c2_77, %c0_78, %c0_79] : memref<3x64x128xbf16, #tpu.memory_space<vmem>>, vector<1x64x128xbf16>
    %166 = vector.shape_cast %165 : vector<1x64x128xbf16> to vector<64x128xbf16>
    %cst_80 = arith.constant dense<0.000000e+00> : vector<8x128xf32>
    %167 = tpu.matmul %164, %166, %cst_80 {dimension_numbers = #tpu.dot_dimension_numbers<[1], [0], [0], [1], [0, 0, 1, 1], [], []>} : vector<8x64xbf16>, vector<64x128xbf16>, vector<8x128xf32> -> vector<8x128xf32>
    %168 = arith.addf %126, %167 : vector<8x128xf32>
    %c0_81 = arith.constant 0 : index
    %c0_82 = arith.constant 0 : index
    %169 = vector.load %arg5[%c0_81, %c0_82] : memref<1x128xf32, #tpu.memory_space<vmem>>, vector<1x128xf32>
    %170 = vector.broadcast %169 : vector<1x128xf32> to vector<8x128xf32>
    %171 = arith.addf %168, %170 : vector<8x128xf32>
    %c0_83 = arith.constant 0 : index
    %c0_84 = arith.constant 0 : index
    %172 = vector.load %arg6[%c0_83, %c0_84] : memref<8x128xf32, #tpu.memory_space<vmem>>, vector<8x128xf32>
    tpu.vector_store %arg6[%c0_83, %c0_84], %171 {strides = array<i32>} : memref<8x128xf32, #tpu.memory_space<vmem>>, vector<8x128xf32>,
    return
  }
  func.func @transform_0(%arg0: i32) -> (i32, i32, i32) {
    %c0_i32 = arith.constant 0 : i32
    %c0_i32_0 = arith.constant 0 : i32
    %c0_i32_1 = arith.constant 0 : i32
    return %c0_i32, %arg0, %c0_i32_0 : i32, i32, i32
  }
  func.func @transform_1(%arg0: i32) -> (i32, i32, i32) {
    %c0_i32 = arith.constant 0 : i32
    %c0_i32_0 = arith.constant 0 : i32
    %c0_i32_1 = arith.constant 0 : i32
    return %c0_i32, %arg0, %c0_i32_0 : i32, i32, i32
  }
  func.func @transform_2(%arg0: i32) -> (i32, i32) {
    %c0_i32 = arith.constant 0 : i32
    %c0_i32_0 = arith.constant 0 : i32
    %c0_i32_1 = arith.constant 0 : i32
    return %c0_i32, %c0_i32_0 : i32, i32
  }
  func.func @transform_3(%arg0: i32) -> (i32, i32, i32) {
    %c0_i32 = arith.constant 0 : i32
    %c0_i32_0 = arith.constant 0 : i32
    %c0_i32_1 = arith.constant 0 : i32
    %c0_i32_2 = arith.constant 0 : i32
    return %c0_i32, %c0_i32_0, %c0_i32_1 : i32, i32, i32
  }
  func.func @transform_4(%arg0: i32) -> (i32, i32) {
    %c0_i32 = arith.constant 0 : i32
    %c0_i32_0 = arith.constant 0 : i32
    %c0_i32_1 = arith.constant 0 : i32
    return %c0_i32, %c0_i32_0 : i32, i32
  }
  func.func @transform_5(%arg0: i32) -> (i32, i32) {
    %c0_i32 = arith.constant 0 : i32
    %c0_i32_0 = arith.constant 0 : i32
    return %arg0, %c0_i32 : i32, i32
  }
}

</mosaic_0001>

<llo_original>
// kernel: tpu_custom_call.1
$region0: #{tpu_custom_call.1}
  #allocation0 [shape = 'u32[]', space=smem, size = 0x4, offset = 0x4, fixed_abs, tag = 'smem constant byte address 0x4 - core index']
  #allocation1 [shape = 'u32[144,128]{1,0:T(1,128)}', space=vmem, size = 0x12000, scoped, tag = 'internal scratch']
  %s0 = inlined_call_operand.hbm [shape: bf16[3,40,64], index: 0, kind: input, shape index: {}]
  %s1 = inlined_call_operand.hbm [shape: bf16[3,40,64], index: 1, kind: input, shape index: {}]
  %s2 = inlined_call_operand.vmem [shape: f32[3,3], index: 2, kind: input, shape index: {}]
  %s3 = inlined_call_operand.hbm [shape: bf16[3,64,128], index: 3, kind: input, shape index: {}]
  %s4 = inlined_call_operand.vmem [shape: f32[1,128], index: 4, kind: input, shape index: {}]
  %s5 = inlined_call_operand.hbm [shape: f32[40,128], index: 5, kind: output, shape index: {}]
  %s6 = sld [smem:[#allocation0]]
  $region69: #{tpu_custom_call.1} parent=0
    _
  %s8 = ssub.s32 1, %s6
  %s9 = scalar_select 0, %s8, %s6
  $region1: #{tpu_custom_call.1} parent=0
    #allocation2 [shape = 'u8[12288]{0}', space=vmem, size = 0x3000, scoped, tag = 'input window, operand 0']
    #allocation3 [shape = 's32[2]{0}', space=sflag, size = 0x8, scoped, tag = 'scoped memory for tpu_custom_call.1']
    #allocation4 [shape = 's32[2]{0}', space=sflag, size = 0x8, scoped, tag = 'scoped memory for tpu_custom_call.1']
    #allocation5 [shape = 's32[2]{0}', space=sflag, size = 0x8, scoped, tag = 'scoped memory for tpu_custom_call.1']
    #allocation6 [shape = 'u8[12288]{0}', space=vmem, size = 0x3000, scoped, tag = 'input window, operand 1']
    #allocation7 [shape = 's32[2]{0}', space=sflag, size = 0x8, scoped, tag = 'scoped memory for tpu_custom_call.1']
    #allocation8 [shape = 'u8[2048]{0}', space=smem, size = 0x800, scoped, tag = 'input window, operand 2, single buffered']
    #allocation9 [shape = 'u8[49152]{0}', space=vmem, size = 0xc000, scoped, tag = 'input window, operand 3, single buffered']
    #allocation10 [shape = 'u8[8192]{0}', space=vmem, size = 0x2000, scoped, tag = 'output window, operand 0']
    %10 = vsyncpa [#allocation3], 0
    %s11 = scalar_lea.sflag [#allocation3], 1
    %12 = vsyncpa %s11, 0
    %13 = vsyncpa [#allocation7], 0
    %s14 = scalar_lea.sflag [#allocation7], 1
    %15 = vsyncpa %s14, 0
    %16 = vsyncpa [#allocation5], 0
    %17 = vsyncpa [#allocation4], 0
    %s18 = scalar_lea.sflag [#allocation4], 1
    %19 = vsyncpa %s18, 0
    loop: start=0, step=1, limit=7
    $region2: #{tpu_custom_call.1} parent=1 // loop_pre_header
      _
    $region3: #{tpu_custom_call.1} parent=1 // loop_header
      %s21 = sphi 0, %s25
      %p22 = scmp.ge.s32.totalorder %s21, 7
      %s31 = sphi 0, %s33
      %s34 = sphi 0, %s31
      %s35 = sphi 0, %s34
      %s51 = sphi 0, %s35
      %s57 = sphi 0, %s59
      %s60 = sphi 0, %s57
      %s61 = sphi 0, %s60
      %s77 = sphi 0, %s61
      %s81 = sphi 0, %s81
      %s83 = sphi 0, %s81
      %s84 = sphi 0, %s83
      %s98 = sphi 0, %s84
      %s102 = sphi 0, %s102
      %s104 = sphi 0, %s102
      %s105 = sphi 0, %s104
      %s119 = sphi 0, %s105
      %s123 = sphi 0, %s123
      %s125 = sphi 0, %s123
      %s126 = sphi 0, %s125
      %s140 = sphi 0, %s126
      %s146 = sphi 0, %s148
      %s149 = sphi 0, %s146
      %s150 = sphi 0, %s149
      %s166 = sphi 0, %s150
    $region4: #{tpu_custom_call.1} parent=1 // loop_header_branch
      %24 = sbr.rel (%p22) target = $region8
    $region5: #{tpu_custom_call.1} parent=1 // loop_body
      %s26 = ssub.s32 %s21, 1
      %s27 = ssub.s32 %s21, 2
      %s28 = sadd.s32 %s21, 1
      %s29 = ssub.s32 %s21, %s28
      %p30 = scmp.eq.s32.totalorder %s29, 0
      %s32 = sadd.s32 %s31, 1
      %s33 = scalar_select %p30, %s31, %s32
      %p36 = pneg %p30
      %p37 = scmp.eq.s32.totalorder %s21, 4
      %p38 = por %p36, %p37
      %p39 = scmp.ne.s32.totalorder %s31, %s34
      %p40 = scmp.eq.s32.totalorder %s21, 0
      %p41 = por %p39, %p40
      %p42 = scmp.ne.s32.totalorder %s31, %s34
      %p43 = scmp.eq.s32.totalorder %s26, 4
      %p44 = por %p42, %p43
      %p45 = scmp.ne.s32.totalorder %s34, %s35
      %p46 = scmp.eq.s32.totalorder %s26, 0
      %p47 = por %p45, %p46
      %p48 = scmp.ne.s32.totalorder %s34, %s35
      %p49 = scmp.eq.s32.totalorder %s27, 4
      %p50 = por %p48, %p49
      %p52 = scmp.ne.s32.totalorder %s35, %s51
      %p53 = scmp.eq.s32.totalorder %s27, 0
      %p54 = por %p52, %p53
      %s55 = ssub.s32 %s21, %s28
      %p56 = scmp.eq.s32.totalorder %s55, 0
      %s58 = sadd.s32 %s57, 1
      %s59 = scalar_select %p56, %s57, %s58
      %p62 = pneg %p56
      %p63 = scmp.eq.s32.totalorder %s21, 4
      %p64 = por %p62, %p63
      %p65 = scmp.ne.s32.totalorder %s57, %s60
      %p66 = scmp.eq.s32.totalorder %s21, 0
      %p67 = por %p65, %p66
      %p68 = scmp.ne.s32.totalorder %s57, %s60
      %p69 = scmp.eq.s32.totalorder %s26, 4
      %p70 = por %p68, %p69
      %p71 = scmp.ne.s32.totalorder %s60, %s61
      %p72 = scmp.eq.s32.totalorder %s26, 0
      %p73 = por %p71, %p72
      %p74 = scmp.ne.s32.totalorder %s60, %s61
      %p75 = scmp.eq.s32.totalorder %s27, 4
      %p76 = por %p74, %p75
      %p78 = scmp.ne.s32.totalorder %s61, %s77
      %p79 = scmp.eq.s32.totalorder %s27, 0
      %p80 = por %p78, %p79
      %s82 = sadd.s32 %s81, 1
      %p85 = scmp.eq.s32.totalorder %s21, 4
      %p86 = scmp.ne.s32.totalorder %s81, %s83
      %p87 = scmp.eq.s32.totalorder %s21, 0
      %p88 = por %p86, %p87
      %p89 = scmp.ne.s32.totalorder %s81, %s83
      %p90 = scmp.eq.s32.totalorder %s26, 4
      %p91 = por %p89, %p90
      %p92 = scmp.ne.s32.totalorder %s83, %s84
      %p93 = scmp.eq.s32.totalorder %s26, 0
      %p94 = por %p92, %p93
      %p95 = scmp.ne.s32.totalorder %s83, %s84
      %p96 = scmp.eq.s32.totalorder %s27, 4
      %p97 = por %p95, %p96
      %p99 = scmp.ne.s32.totalorder %s84, %s98
      %p100 = scmp.eq.s32.totalorder %s27, 0
      %p101 = por %p99, %p100
      %s103 = sadd.s32 %s102, 1
      %p106 = scmp.eq.s32.totalorder %s21, 4
      %p107 = scmp.ne.s32.totalorder %s102, %s104
      %p108 = scmp.eq.s32.totalorder %s21, 0
      %p109 = por %p107, %p108
      %p110 = scmp.ne.s32.totalorder %s102, %s104
      %p111 = scmp.eq.s32.totalorder %s26, 4
      %p112 = por %p110, %p111
      %p113 = scmp.ne.s32.totalorder %s104, %s105
      %p114 = scmp.eq.s32.totalorder %s26, 0
      %p115 = por %p113, %p114
      %p116 = scmp.ne.s32.totalorder %s104, %s105
      %p117 = scmp.eq.s32.totalorder %s27, 4
      %p118 = por %p116, %p117
      %p120 = scmp.ne.s32.totalorder %s105, %s119
      %p121 = scmp.eq.s32.totalorder %s27, 0
      %p122 = por %p120, %p121
      %s124 = sadd.s32 %s123, 1
      %p127 = scmp.eq.s32.totalorder %s21, 4
      %p128 = scmp.ne.s32.totalorder %s123, %s125
      %p129 = scmp.eq.s32.totalorder %s21, 0
      %p130 = por %p128, %p129
      %p131 = scmp.ne.s32.totalorder %s123, %s125
      %p132 = scmp.eq.s32.totalorder %s26, 4
      %p133 = por %p131, %p132
      %p134 = scmp.ne.s32.totalorder %s125, %s126
      %p135 = scmp.eq.s32.totalorder %s26, 0
      %p136 = por %p134, %p135
      %p137 = scmp.ne.s32.totalorder %s125, %s126
      %p138 = scmp.eq.s32.totalorder %s27, 4
      %p139 = por %p137, %p138
      %p141 = scmp.ne.s32.totalorder %s126, %s140
      %p142 = scmp.eq.s32.totalorder %s27, 0
      %p143 = por %p141, %p142
      %s144 = ssub.s32 %s21, %s28
      %p145 = scmp.eq.s32.totalorder %s144, 0
      %s147 = sadd.s32 %s146, 1
      %s148 = scalar_select %p145, %s146, %s147
      %p151 = pneg %p145
      %p152 = scmp.eq.s32.totalorder %s21, 4
      %p153 = por %p151, %p152
      %p154 = scmp.ne.s32.totalorder %s146, %s149
      %p155 = scmp.eq.s32.totalorder %s21, 0
      %p156 = por %p154, %p155
      %p157 = scmp.ne.s32.totalorder %s146, %s149
      %p158 = scmp.eq.s32.totalorder %s26, 4
      %p159 = por %p157, %p158
      %p160 = scmp.ne.s32.totalorder %s149, %s150
      %p161 = scmp.eq.s32.totalorder %s26, 0
      %p162 = por %p160, %p161
      %p163 = scmp.ne.s32.totalorder %s149, %s150
      %p164 = scmp.eq.s32.totalorder %s27, 4
      %p165 = por %p163, %p164
      %p167 = scmp.ne.s32.totalorder %s150, %s166
      %p168 = scmp.eq.s32.totalorder %s27, 0
      %p169 = por %p167, %p168
      %p170 = scmp.le.s32.totalorder 1, %s21
      %p171 = scmp.lt.s32.totalorder %s21, 6
      %p172 = pnand %p170, %p171
      %p173 = pneg %p172
      // Predicated region
      $region9: #{tpu_custom_call.1} parent=5 // pred_check
        _
      $region10: #{tpu_custom_call.1} parent=5 // pred_check_branch
        %175 = sbr.rel (%p172) target = $region12
      $region11: #{tpu_custom_call.1} parent=5 // pred_region
        %s176 = ssub.s32 %s21, 1
        // Predicated region
        $region13: #{tpu_custom_call.1} parent=11 // pred_check
          %p177 = pneg %p94
        $region14: #{tpu_custom_call.1} parent=11 // pred_check_branch
          %179 = sbr.rel (%p177) target = $region16
        $region15: #{tpu_custom_call.1} parent=11 // pred_region
          %s181 = ssub.s32 64, 64
          %182 = vsyncadd [#allocation5], %s181
          %s184 = sshll.u32 %s2, 4
          %s185 = int_to_ptr.vmem [resolvable:$true] %s184
          %187 = dma.vmem_to_smem %s185, 64, [#allocation8], [#allocation5]
        $region16: #{tpu_custom_call.1} parent=11 // pred_fallthru
          _
        // Predicated region
        $region17: #{tpu_custom_call.1} parent=11 // pred_check
          %p188 = pneg %p115
        $region18: #{tpu_custom_call.1} parent=11 // pred_check_branch
          %190 = sbr.rel (%p188) target = $region20
        $region19: #{tpu_custom_call.1} parent=11 // pred_region
          %s192 = ssub.s32 1536, 1536
          %193 = vsyncadd [#allocation7], %s192
          %s194 = sshll.u32 [#allocation9], 4
          %s195 = int_to_ptr.vmem [resolvable:$true] %s194
          %200 = dma.hbm_to_vmem [thread:$0]  %s3, 1536, %s195, [#allocation7], 64, 64, 4
        $region20: #{tpu_custom_call.1} parent=11 // pred_fallthru
          _
        // Predicated region
        $region21: #{tpu_custom_call.1} parent=11 // pred_check
          %p201 = pneg %p136
        $region22: #{tpu_custom_call.1} parent=11 // pred_check_branch
          %203 = sbr.rel (%p201) target = $region24
        $region23: #{tpu_custom_call.1} parent=11 // pred_region
          _
        $region24: #{tpu_custom_call.1} parent=11 // pred_fallthru
          _
      $region12: #{tpu_custom_call.1} parent=5 // pred_fallthru
        _
      %p204 = scmp.lt.s32.totalorder %s21, 5
      // Predicated region
      $region25: #{tpu_custom_call.1} parent=5 // pred_check
        %p205 = pneg %p204
      $region26: #{tpu_custom_call.1} parent=5 // pred_check_branch
        %207 = sbr.rel (%p205) target = $region28
      $region27: #{tpu_custom_call.1} parent=5 // pred_region
        // Predicated region
        $region29: #{tpu_custom_call.1} parent=27 // pred_check
          %p208 = pneg %p41
        $region30: #{tpu_custom_call.1} parent=27 // pred_check_branch
          %210 = sbr.rel (%p208) target = $region32
        $region31: #{tpu_custom_call.1} parent=27 // pred_region
          %s211 = sand.u32 %s31, 1
          %s212 = scalar_lea.sflag [#allocation3], %s211
          %s213 = sand.u32 %s31, 1
          %s214 = smul.addr %s213, 12
          %s215 = scalar_lea.vmem [#allocation2], %s214
          %s217 = ssub.s32 192, 192
          %218 = vsyncadd %s212, %s217
          %s219 = smul.addr %s21, 64
          %s220 = scalar_lea.hbm %s0, %s219
          %s221 = sshll.u32 %s215, 4
          %s222 = int_to_ptr.vmem [resolvable:$true] %s221
          %227 = dma.hbm_to_vmem [thread:$0]  %s220, 192, %s222, %s212, 320, 64, 4
        $region32: #{tpu_custom_call.1} parent=27 // pred_fallthru
          _
        // Predicated region
        $region33: #{tpu_custom_call.1} parent=27 // pred_check
          %p228 = pneg %p67
        $region34: #{tpu_custom_call.1} parent=27 // pred_check_branch
          %230 = sbr.rel (%p228) target = $region36
        $region35: #{tpu_custom_call.1} parent=27 // pred_region
          %s231 = sand.u32 %s21, 1
          %s232 = scalar_lea.sflag [#allocation7], %s231
          %s233 = sand.u32 %s57, 1
          %s234 = smul.addr %s233, 12
          %s235 = scalar_lea.vmem [#allocation6], %s234
          %s237 = ssub.s32 192, 192
          %238 = vsyncadd %s232, %s237
          %s239 = smul.addr %s21, 64
          %s240 = scalar_lea.hbm %s1, %s239
          %s241 = sshll.u32 %s235, 4
          %s242 = int_to_ptr.vmem [resolvable:$true] %s241
          %247 = dma.hbm_to_vmem [thread:$0]  %s240, 192, %s242, %s232, 320, 64, 4
        $region36: #{tpu_custom_call.1} parent=27 // pred_fallthru
          _
      $region28: #{tpu_custom_call.1} parent=5 // pred_fallthru
        _
      %p248 = scmp.le.s32.totalorder 1, %s21
      %p249 = scmp.lt.s32.totalorder %s21, 6
      %p250 = pnand %p248, %p249
      %p251 = pneg %p250
      // Predicated region
      $region37: #{tpu_custom_call.1} parent=5 // pred_check
        _
      $region38: #{tpu_custom_call.1} parent=5 // pred_check_branch
        %253 = sbr.rel (%p250) target = $region40
      $region39: #{tpu_custom_call.1} parent=5 // pred_region
        %s254 = ssub.s32 %s21, 1
        %s255 = sand.u32 %s34, 1
        %s256 = scalar_lea.sflag [#allocation3], %s255
        %s257 = sand.u32 %s34, 1
        %s258 = smul.addr %s257, 12
        %s259 = scalar_lea.vmem [#allocation2], %s258
        // Predicated region
        $region41: #{tpu_custom_call.1} parent=39 // pred_check
          %p260 = pneg %p47
        $region42: #{tpu_custom_call.1} parent=39 // pred_check_branch
          %262 = sbr.rel (%p260) target = $region44
        $region43: #{tpu_custom_call.1} parent=39 // pred_region
          %263 = dma.done %s256, 192
        $region44: #{tpu_custom_call.1} parent=39 // pred_fallthru
          _
        %s264 = sand.u32 %s26, 1
        %s265 = scalar_lea.sflag [#allocation7], %s264
        %s266 = sand.u32 %s60, 1
        %s267 = smul.addr %s266, 12
        %s268 = scalar_lea.vmem [#allocation6], %s267
        // Predicated region
        $region45: #{tpu_custom_call.1} parent=39 // pred_check
          %p269 = pneg %p73
        $region46: #{tpu_custom_call.1} parent=39 // pred_check_branch
          %271 = sbr.rel (%p269) target = $region48
        $region47: #{tpu_custom_call.1} parent=39 // pred_region
          %272 = dma.done %s265, 192
        $region48: #{tpu_custom_call.1} parent=39 // pred_fallthru
          _
        // Predicated region
        $region49: #{tpu_custom_call.1} parent=39 // pred_check
          %p273 = pneg %p94
        $region50: #{tpu_custom_call.1} parent=39 // pred_check_branch
          %275 = sbr.rel (%p273) target = $region52
        $region51: #{tpu_custom_call.1} parent=39 // pred_region
          %276 = dma.done [#allocation5], 64
        $region52: #{tpu_custom_call.1} parent=39 // pred_fallthru
          _
        // Predicated region
        $region53: #{tpu_custom_call.1} parent=39 // pred_check
          %p277 = pneg %p115
        $region54: #{tpu_custom_call.1} parent=39 // pred_check_branch
          %279 = sbr.rel (%p277) target = $region56
        $region55: #{tpu_custom_call.1} parent=39 // pred_region
          %280 = dma.done [#allocation7], 1536
        $region56: #{tpu_custom_call.1} parent=39 // pred_fallthru
          _
        %281 = sfence
        %s282 = sand.u32 %s34, 1
        %s283 = scalar_lea.sflag [#allocation3], %s282
        %s284 = sand.u32 %s34, 1
        %s285 = smul.addr %s284, 12
        %s286 = scalar_lea.vmem [#allocation2], %s285
        %p287 = pneg %p47
        %p288 = pneg %p44
        %s289 = sand.u32 %s26, 1
        %s290 = scalar_lea.sflag [#allocation7], %s289
        %s291 = sand.u32 %s60, 1
        %s292 = smul.addr %s291, 12
        %s293 = scalar_lea.vmem [#allocation6], %s292
        %p294 = pneg %p73
        %p295 = pneg %p70
        %p296 = pneg %p94
        %p297 = pneg %p91
        %p298 = pneg %p115
        %p299 = pneg %p112
        %p300 = pneg %p136
        %p301 = pneg %p133
        %p302 = pneg %p162
        %p303 = pneg %p159
        %s304 = sand.u32 %s149, 1
        %s305 = scalar_lea.sflag [#allocation4], %s304
        %s306 = sand.u32 %s149, 1
        %s307 = smul.addr %s306, 8
        %s308 = scalar_lea.vmem [#allocation10], %s307
        %v310 = vld [vmem:[%s259] sm:$0xf]
        %v311 = vunpack.c.l.bf16 %v310
        %s312 = scalar_lea.vmem %s259, 4 [#allocation2]
        %v313 = vld [vmem:[%s312] sm:$0xf]
        %v314 = vunpack.c.l.bf16 %v313
        %s315 = scalar_lea.vmem %s259, 8 [#allocation2]
        %v316 = vld [vmem:[%s315] sm:$0xf]
        %v317 = vunpack.c.l.bf16 %v316
        %v318 = vld [vmem:[%s268] sm:$0xf]
        %v319 = vunpack.c.l.bf16 %v318
        %s320 = scalar_lea.vmem %s268, 4 [#allocation6]
        %v321 = vld [vmem:[%s320] sm:$0xf]
        %v322 = vunpack.c.l.bf16 %v321
        %s323 = scalar_lea.vmem %s268, 8 [#allocation6]
        %v324 = vld [vmem:[%s323] sm:$0xf]
        %v325 = vunpack.c.l.bf16 %v324
        %vm326 = vcmask 523264
        %v327 = vsel %vm326, %v311, 0.0
        %328 = vadd.xlane.f32.xlu0 %v327
        %v329 = vpop.xlane.xlu0 %328
        %v330 = vrcp.pop 64.0
        %v331 = vmul.f32 %v329, %v330
        %v332 = vsel %vm326, %v314, 0.0
        %333 = vadd.xlane.f32.xlu0 %v332
        %v334 = vpop.xlane.xlu0 %333
        %v335 = vmul.f32 %v334, %v330
        %v336 = vsel %vm326, %v317, 0.0
        %337 = vadd.xlane.f32.xlu0 %v336
        %v338 = vpop.xlane.xlu0 %337
        %v339 = vmul.f32 %v338, %v330
        %v340 = vsel %vm326, %v319, 0.0
        %341 = vadd.xlane.f32.xlu0 %v340
        %v342 = vpop.xlane.xlu0 %341
        %v343 = vmul.f32 %v342, %v330
        %v344 = vsel %vm326, %v322, 0.0
        %345 = vadd.xlane.f32.xlu0 %v344
        %v346 = vpop.xlane.xlu0 %345
        %v347 = vmul.f32 %v346, %v330
        %v348 = vsel %vm326, %v325, 0.0
        %349 = vadd.xlane.f32.xlu0 %v348
        %v350 = vpop.xlane.xlu0 %349
        %v351 = vmul.f32 %v350, %v330
        %s352 = sld [smem:[#allocation8]]
        %v353 = vstv %s352
        %v354 = vmul.f32 %v331, %v353
        %v355 = vmul.f32 %v343, %v353
        %s356 = sld [smem:[#allocation8 + $0x1]]
        %v357 = vstv %s356
        %v358 = vmul.f32 %v335, %v357
        %v359 = vadd.f32 %v354, %v358
        %v360 = vmul.f32 %v347, %v357
        %v361 = vadd.f32 %v355, %v360
        %s362 = sld [smem:[#allocation8 + $0x2]]
        %v363 = vstv %s362
        %v364 = vmul.f32 %v339, %v363
        %v365 = vadd.f32 %v359, %v364
        %v366 = vmul.f32 %v351, %v363
        %v367 = vadd.f32 %v361, %v366
        %v368 = vxor.u32 %v365, 2147483648
        %v369 = vmul.f32 %v368, 1.442695
        %v370 = vpow.pop %v369
        %v371 = vadd.f32 %v370, 1.0
        %v372 = vrcp.pop %v371
        %v373 = vmul.f32 1.0, %v372
        %v374 = vmul.f32 %v311, %v373
        %v375 = vxor.u32 %v367, 2147483648
        %v376 = vmul.f32 %v375, 1.442695
        %v377 = vpow.pop %v376
        %v378 = vadd.f32 %v377, 1.0
        %v379 = vrcp.pop %v378
        %v380 = vmul.f32 1.0, %v379
        %v381 = vmul.f32 %v319, %v380
        %v382 = vadd.f32 %v374, %v381
        %v383 = vpack.c.bf16 %v382, %v382
        %v384 = vld [vmem:[#allocation9] sm:$0xf]
        %v385 = vld [vmem:[#allocation9 + $0x4] sm:$0xf]
        %v386 = vld [vmem:[#allocation9 + $0x8] sm:$0xf]
        %v387 = vld [vmem:[#allocation9 + $0xc] sm:$0xf]
        %v388 = vld [vmem:[#allocation9 + $0x10] sm:$0xf]
        %v389 = vld [vmem:[#allocation9 + $0x14] sm:$0xf]
        %v390 = vld [vmem:[#allocation9 + $0x18] sm:$0xf]
        %v391 = vld [vmem:[#allocation9 + $0x1c] sm:$0xf]
        %s392 = sld [smem:[#allocation8 + $0x80]]
        %v393 = vstv %s392
        %v394 = vmul.f32 %v331, %v393
        %v395 = vmul.f32 %v343, %v393
        %s396 = sld [smem:[#allocation8 + $0x81]]
        %v397 = vstv %s396
        %v398 = vmul.f32 %v335, %v397
        %v399 = vadd.f32 %v394, %v398
        %v400 = vmul.f32 %v347, %v397
        %v401 = vadd.f32 %v395, %v400
        %s402 = sld [smem:[#allocation8 + $0x82]]
        %v403 = vstv %s402
        %v404 = vmul.f32 %v339, %v403
        %v405 = vadd.f32 %v399, %v404
        %v406 = vmul.f32 %v351, %v403
        %v407 = vadd.f32 %v401, %v406
        %v408 = vxor.u32 %v405, 2147483648
        %v409 = vmul.f32 %v408, 1.442695
        %v410 = vpow.pop %v409
        %v411 = vadd.f32 %v410, 1.0
        %v412 = vrcp.pop %v411
        %v413 = vmul.f32 1.0, %v412
        %v414 = vmul.f32 %v314, %v413
        %v415 = vxor.u32 %v407, 2147483648
        %v416 = vmul.f32 %v415, 1.442695
        %v417 = vpow.pop %v416
        %v418 = vadd.f32 %v417, 1.0
        %v419 = vrcp.pop %v418
        %v420 = vmul.f32 1.0, %v419
        %v421 = vmul.f32 %v322, %v420
        %v422 = vadd.f32 %v414, %v421
        %v423 = vpack.c.bf16 %v422, %v422
        %s424 = scalar_lea.vmem [#allocation9], 32
        %v425 = vld [vmem:[%s424] sm:$0xf]
        %v426 = vld [vmem:[%s424 + $0x4] sm:$0xf]
        %v427 = vld [vmem:[%s424 + $0x8] sm:$0xf]
        %v428 = vld [vmem:[%s424 + $0xc] sm:$0xf]
        %v429 = vld [vmem:[%s424 + $0x10] sm:$0xf]
        %v430 = vld [vmem:[%s424 + $0x14] sm:$0xf]
        %v431 = vld [vmem:[%s424 + $0x18] sm:$0xf]
        %v432 = vld [vmem:[%s424 + $0x1c] sm:$0xf]
        %v441 = vunpack.c.l.b16 %v425
        %v442 = vunpack.c.l.b16 %v426
        %v443 = vunpack.c.l.b16 %v427
        %v444 = vunpack.c.l.b16 %v428
        %v445 = vunpack.c.l.b16 %v429
        %v446 = vunpack.c.l.b16 %v430
        %v447 = vunpack.c.l.b16 %v431
        %v448 = vunpack.c.l.b16 %v432
        %v449 = vpack.c.b16 %v442, %v441
        %v450 = vpack.c.b16 %v444, %v443
        %v451 = vpack.c.b16 %v446, %v445
        %v452 = vpack.c.b16 %v448, %v447
        %v458 = vsel %vm326, %v423, 0
        %460 = vmatprep.subr.bf16.mxu0 0
        %461 = vmatpush1.bf16.msra.mxu0 %v449
        %462 = vmatprep.subr.bf16.mxu0 0
        %463 = vmatpush1.bf16.msra.mxu0 %v450
        %464 = vmatprep.subr.bf16.mxu0 0
        %465 = vmatpush1.bf16.msra.mxu0 %v451
        %466 = vmatprep.subr.bf16.mxu0 0
        %467 = vmatpush1.bf16.msra.mxu0 %v452
        %468 = vmatprep.subr.bf16.mxu0 0
        %469 = vmatpush1.bf16.msra.mxu0 0
        %470 = vmatprep.subr.bf16.mxu0 0
        %471 = vmatpush1.bf16.msra.mxu0 0
        %472 = vmatprep.subr.bf16.mxu0 0
        %473 = vmatpush1.bf16.msra.mxu0 0
        %474 = vmatprep.subr.bf16.mxu0 0
        %475 = vmatpush1.bf16.msra.mxu0 0
        %476 = vmatprep.subr.bf16.mxu0 0
        %477 = vmatpush1.bf16.msra.mxu0 0
        %478 = vmatprep.subr.bf16.mxu0 0
        %479 = vmatpush1.bf16.msra.mxu0 0
        %480 = vmatprep.subr.bf16.mxu0 0
        %481 = vmatpush1.bf16.msra.mxu0 0
        %482 = vmatprep.subr.bf16.mxu0 0
        %483 = vmatpush1.bf16.msra.mxu0 0
        %484 = vmatprep.subr.bf16.mxu0 0
        %485 = vmatpush1.bf16.msra.mxu0 0
        %486 = vmatprep.subr.bf16.mxu0 0
        %487 = vmatpush1.bf16.msra.mxu0 0
        %488 = vmatprep.subr.bf16.mxu0 0
        %489 = vmatpush1.bf16.msra.mxu0 0
        %490 = vmatprep.subr.bf16.mxu0 0
        %491 = vmatpush1.bf16.msra.mxu0 0
        %492 = vmatprep.mubr.bf16.mxu0 0
        %493 = vmatmul.mubr.bf16.gmra.mrb[0].mxu0 %v458
        %v494 = vpop.f32.mrb[0].mxu0
        %v495 = vadd.f32 0.0, %v494
        %v496 = vpop.f32.mrb[0].mxu0
        %v497 = vpop.f32.mrb[0].mxu0
        %v498 = vpop.f32.mrb[0].mxu0
        %499 = vdwg.mxu0
        %v508 = vunpack.c.l.b16 %v384
        %v509 = vunpack.c.l.b16 %v385
        %v510 = vunpack.c.l.b16 %v386
        %v511 = vunpack.c.l.b16 %v387
        %v512 = vunpack.c.l.b16 %v388
        %v513 = vunpack.c.l.b16 %v389
        %v514 = vunpack.c.l.b16 %v390
        %v515 = vunpack.c.l.b16 %v391
        %v516 = vpack.c.b16 %v509, %v508
        %v517 = vpack.c.b16 %v511, %v510
        %v518 = vpack.c.b16 %v513, %v512
        %v519 = vpack.c.b16 %v515, %v514
        %v525 = vsel %vm326, %v383, 0
        %527 = vmatprep.subr.bf16.mxu0 0
        %528 = vmatpush1.bf16.msra.mxu0 %v516
        %529 = vmatprep.subr.bf16.mxu0 0
        %530 = vmatpush1.bf16.msra.mxu0 %v517
        %531 = vmatprep.subr.bf16.mxu0 0
        %532 = vmatpush1.bf16.msra.mxu0 %v518
        %533 = vmatprep.subr.bf16.mxu0 0
        %534 = vmatpush1.bf16.msra.mxu0 %v519
        %535 = vmatprep.subr.bf16.mxu0 0
        %536 = vmatpush1.bf16.msra.mxu0 0
        %537 = vmatprep.subr.bf16.mxu0 0
        %538 = vmatpush1.bf16.msra.mxu0 0
        %539 = vmatprep.subr.bf16.mxu0 0
        %540 = vmatpush1.bf16.msra.mxu0 0
        %541 = vmatprep.subr.bf16.mxu0 0
        %542 = vmatpush1.bf16.msra.mxu0 0
        %543 = vmatprep.subr.bf16.mxu0 0
        %544 = vmatpush1.bf16.msra.mxu0 0
        %545 = vmatprep.subr.bf16.mxu0 0
        %546 = vmatpush1.bf16.msra.mxu0 0
        %547 = vmatprep.subr.bf16.mxu0 0
        %548 = vmatpush1.bf16.msra.mxu0 0
        %549 = vmatprep.subr.bf16.mxu0 0
        %550 = vmatpush1.bf16.msra.mxu0 0
        %551 = vmatprep.subr.bf16.mxu0 0
        %552 = vmatpush1.bf16.msra.mxu0 0
        %553 = vmatprep.subr.bf16.mxu0 0
        %554 = vmatpush1.bf16.msra.mxu0 0
        %555 = vmatprep.subr.bf16.mxu0 0
        %556 = vmatpush1.bf16.msra.mxu0 0
        %557 = vmatprep.subr.bf16.mxu0 0
        %558 = vmatpush1.bf16.msra.mxu0 0
        %559 = vmatprep.mubr.bf16.mxu0 0
        %560 = vmatmul.mubr.bf16.gmra.mrb[0].mxu0 %v525
        %v561 = vpop.f32.mrb[0].mxu0
        %v562 = vadd.f32 %v495, %v561
        %v563 = vpop.f32.mrb[0].mxu0
        %v564 = vpop.f32.mrb[0].mxu0
        %v565 = vpop.f32.mrb[0].mxu0
        %566 = vdwg.mxu0
        %s567 = sld [smem:[#allocation8 + $0x100]]
        %v568 = vstv %s567
        %v569 = vmul.f32 %v331, %v568
        %v570 = vmul.f32 %v343, %v568
        %s571 = sld [smem:[#allocation8 + $0x101]]
        %v572 = vstv %s571
        %v573 = vmul.f32 %v335, %v572
        %v574 = vadd.f32 %v569, %v573
        %v575 = vmul.f32 %v347, %v572
        %v576 = vadd.f32 %v570, %v575
        %s577 = sld [smem:[#allocation8 + $0x102]]
        %v578 = vstv %s577
        %v579 = vmul.f32 %v339, %v578
        %v580 = vadd.f32 %v574, %v579
        %v581 = vmul.f32 %v351, %v578
        %v582 = vadd.f32 %v576, %v581
        %v583 = vxor.u32 %v580, 2147483648
        %v584 = vmul.f32 %v583, 1.442695
        %v585 = vpow.pop %v584
        %v586 = vadd.f32 %v585, 1.0
        %v587 = vrcp.pop %v586
        %v588 = vmul.f32 1.0, %v587
        %v589 = vmul.f32 %v317, %v588
        %v590 = vxor.u32 %v582, 2147483648
        %v591 = vmul.f32 %v590, 1.442695
        %v592 = vpow.pop %v591
        %v593 = vadd.f32 %v592, 1.0
        %v594 = vrcp.pop %v593
        %v595 = vmul.f32 1.0, %v594
        %v596 = vmul.f32 %v325, %v595
        %v597 = vadd.f32 %v589, %v596
        %v598 = vpack.c.bf16 %v597, %v597
        %s599 = scalar_lea.vmem [#allocation9], 64
        %v600 = vld [vmem:[%s599] sm:$0xf]
        %v601 = vld [vmem:[%s599 + $0x4] sm:$0xf]
        %v602 = vld [vmem:[%s599 + $0x8] sm:$0xf]
        %v603 = vld [vmem:[%s599 + $0xc] sm:$0xf]
        %v604 = vld [vmem:[%s599 + $0x10] sm:$0xf]
        %v605 = vld [vmem:[%s599 + $0x14] sm:$0xf]
        %v606 = vld [vmem:[%s599 + $0x18] sm:$0xf]
        %v607 = vld [vmem:[%s599 + $0x1c] sm:$0xf]
        %v616 = vunpack.c.l.b16 %v600
        %v617 = vunpack.c.l.b16 %v601
        %v618 = vunpack.c.l.b16 %v602
        %v619 = vunpack.c.l.b16 %v603
        %v620 = vunpack.c.l.b16 %v604
        %v621 = vunpack.c.l.b16 %v605
        %v622 = vunpack.c.l.b16 %v606
        %v623 = vunpack.c.l.b16 %v607
        %v624 = vpack.c.b16 %v617, %v616
        %v625 = vpack.c.b16 %v619, %v618
        %v626 = vpack.c.b16 %v621, %v620
        %v627 = vpack.c.b16 %v623, %v622
        %v633 = vsel %vm326, %v598, 0
        %635 = vmatprep.subr.bf16.mxu0 0
        %636 = vmatpush1.bf16.msra.mxu0 %v624
        %637 = vmatprep.subr.bf16.mxu0 0
        %638 = vmatpush1.bf16.msra.mxu0 %v625
        %639 = vmatprep.subr.bf16.mxu0 0
        %640 = vmatpush1.bf16.msra.mxu0 %v626
        %641 = vmatprep.subr.bf16.mxu0 0
        %642 = vmatpush1.bf16.msra.mxu0 %v627
        %643 = vmatprep.subr.bf16.mxu0 0
        %644 = vmatpush1.bf16.msra.mxu0 0
        %645 = vmatprep.subr.bf16.mxu0 0
        %646 = vmatpush1.bf16.msra.mxu0 0
        %647 = vmatprep.subr.bf16.mxu0 0
        %648 = vmatpush1.bf16.msra.mxu0 0
        %649 = vmatprep.subr.bf16.mxu0 0
        %650 = vmatpush1.bf16.msra.mxu0 0
        %651 = vmatprep.subr.bf16.mxu0 0
        %652 = vmatpush1.bf16.msra.mxu0 0
        %653 = vmatprep.subr.bf16.mxu0 0
        %654 = vmatpush1.bf16.msra.mxu0 0
        %655 = vmatprep.subr.bf16.mxu0 0
        %656 = vmatpush1.bf16.msra.mxu0 0
        %657 = vmatprep.subr.bf16.mxu0 0
        %658 = vmatpush1.bf16.msra.mxu0 0
        %659 = vmatprep.subr.bf16.mxu0 0
        %660 = vmatpush1.bf16.msra.mxu0 0
        %661 = vmatprep.subr.bf16.mxu0 0
        %662 = vmatpush1.bf16.msra.mxu0 0
        %663 = vmatprep.subr.bf16.mxu0 0
        %664 = vmatpush1.bf16.msra.mxu0 0
        %665 = vmatprep.subr.bf16.mxu0 0
        %666 = vmatpush1.bf16.msra.mxu0 0
        %667 = vmatprep.mubr.bf16.mxu0 0
        %668 = vmatmul.mubr.bf16.gmra.mrb[0].mxu0 %v633
        %v669 = vpop.f32.mrb[0].mxu0
        %v670 = vadd.f32 0.0, %v669
        %v671 = vpop.f32.mrb[0].mxu0
        %v672 = vpop.f32.mrb[0].mxu0
        %v673 = vpop.f32.mrb[0].mxu0
        %674 = vdwg.mxu0
        %v675 = vadd.f32 %v562, %v670
        %v676 = vld [vmem:[%s4] sm:$0x1]
        %v678 = vlaneseq
        %v679 = vshrl.u32 %v678, 7
        %v680 = vsub.s32 0, %v679
        %v681 = vrot.slane %v676, %v680
        %v683 = vadd.f32 %v675, %v681
        %684 = vst [vmem:[%s308] sm:$0xff] %v683
        %s685 = sand.u32 %s149, 1
        %s686 = scalar_lea.sflag [#allocation4], %s685
        %s687 = sand.u32 %s149, 1
        %s688 = smul.addr %s687, 8
        %s689 = scalar_lea.vmem [#allocation10], %s688
        // Predicated region
        $region57: #{tpu_custom_call.1} parent=39 // pred_check
          %p690 = pneg %p159
        $region58: #{tpu_custom_call.1} parent=39 // pred_check_branch
          %692 = sbr.rel (%p690) target = $region60
        $region59: #{tpu_custom_call.1} parent=39 // pred_region
          %s694 = ssub.s32 128, 128
          %695 = vsyncadd %s686, %s694
          %s696 = smul.addr %s26, 128
          %s697 = scalar_lea.hbm %s5, %s696
          %s699 = sshll.u32 %s689, 4
          %s700 = int_to_ptr.vmem [resolvable:$true] %s699
          %702 = dma.vmem_to_hbm [thread:$0]  %s700, 128, %s697, %s686
        $region60: #{tpu_custom_call.1} parent=39 // pred_fallthru
          _
      $region40: #{tpu_custom_call.1} parent=5 // pred_fallthru
        _
      %p703 = scmp.le.s32.totalorder 2, %s21
      // Predicated region
      $region61: #{tpu_custom_call.1} parent=5 // pred_check
        %p704 = pneg %p703
      $region62: #{tpu_custom_call.1} parent=5 // pred_check_branch
        %706 = sbr.rel (%p704) target = $region64
      $region63: #{tpu_custom_call.1} parent=5 // pred_region
        %s707 = ssub.s32 %s21, 2
        // Predicated region
        $region65: #{tpu_custom_call.1} parent=63 // pred_check
          %p708 = pneg %p165
        $region66: #{tpu_custom_call.1} parent=63 // pred_check_branch
          %710 = sbr.rel (%p708) target = $region68
        $region67: #{tpu_custom_call.1} parent=63 // pred_region
          %s711 = sand.u32 %s150, 1
          %s712 = scalar_lea.sflag [#allocation4], %s711
          %s713 = sand.u32 %s150, 1
          %s714 = smul.addr %s713, 8
          %s715 = scalar_lea.vmem [#allocation10], %s714
          %716 = dma.done %s712, 128
        $region68: #{tpu_custom_call.1} parent=63 // pred_fallthru
          _
      $region64: #{tpu_custom_call.1} parent=5 // pred_fallthru
        _
    $region6: #{tpu_custom_call.1} parent=1 // loop_footer
      %s25 = sadd.s32 1, %s21
    $region7: #{tpu_custom_call.1} parent=1 // loop_footer_branch
      %20 = sbr.rel target = $region3
    $region8: #{tpu_custom_call.1} parent=1 // loop_exit
      _
    %717 = vsyncpa [#allocation3], 1
    %s718 = scalar_lea.sflag [#allocation3], 1
    %719 = vsyncpa %s718, 1
    %720 = vsyncpa [#allocation7], 1
    %s721 = scalar_lea.sflag [#allocation7], 1
    %722 = vsyncpa %s721, 1
    %723 = vsyncpa [#allocation4], 1
    %s724 = scalar_lea.sflag [#allocation4], 1
    %725 = vsyncpa %s724, 1
    %726 = vsyncpa [#allocation5], 1
    %s727 = scalar_lea.sflag [#allocation5], 1
    %728 = vsyncpa %s727, 1

</llo_original>
